<compile_context>
chip_gen: v6e
topology: v6e:2x2x1
jax: 0.10.0
libtpu: 0.0.40
codegen_flags: <defaults>
</compile_context>

<pallas_src>
import functools

import jax
import jax.numpy as jnp
from jax.experimental import pallas as pl
from jax.experimental.pallas import tpu as pltpu


STATE_DIMS = 6      # [X, Y, V, YAW, YAW_RATE, SLIP_ANGLE]
CONTROL_DIMS = 2    # [STEER_ANGLE, ACCEL]
HIDDEN_DIMS = 10
NUM_LAYERS = 5

LANE = 128              # lane width of the packed weight slab / activations
HP = 128                # rows per hidden/output layer block (== LANE so loads
                        # are lane-dense and the constant-1 bias lane works)
OUT_PAD = 8             # output columns padded 6 -> 8 (block minor == full dim)
_MIN_SPLIT_ROWS = 128   # split a single-tile batch in two once it has this
                        # many rows per half (feeds both v7x TensorCores)


def _round_up(x, m):
    return (x + m - 1) // m * m


def _layout(state_dims, control_dims):
    """Row offsets of the first-layer block inside the packed slab."""
    c_off = _round_up(state_dims, 8)                 # start of W_c rows
    b_off = c_off + _round_up(control_dims, 8)       # row of b0 (+ const-1 lane)
    blk0 = _round_up(b_off + 1, 8)                   # rows of the whole block
    return c_off, b_off, blk0


def _neural_ode_kernel(s_ref, c_ref, slab_ref, o_ref, *,
                       state_dims, control_dims, layers):
    """Whole MLP fused; all operands resident in VMEM.

    s_ref   : (TB, S_d)       states tile
    c_ref   : (TB, C_d)       control tile
    slab_ref: (R, 128) f32    packed weights/biases (see pack_params layout)
    o_ref   : (TB, OUT_PAD)   output tile (cols >= S_d are zero)
    """
    c_off, b_off, blk0 = _layout(state_dims, control_dims)

    s = s_ref[...].astype(jnp.float32)
    c = c_ref[...].astype(jnp.float32)

    # Layer 0 (no activation):  cat([s, c]) @ W0 + b0  ==  s@W_s + c@W_c + b0.
    # The bias row also carries a 1.0 in lane `hidden`, establishing the
    # constant-1 activation lane used to fold all later biases into matmuls.
    w_s = slab_ref[0:state_dims, :]                       # (S_d, 128)
    w_c = slab_ref[c_off:c_off + control_dims, :]         # (C_d, 128)
    b0 = slab_ref[b_off:b_off + 1, :]                     # (1, 128)
    h = (jnp.dot(s, w_s, preferred_element_type=jnp.float32)
         + jnp.dot(c, w_c, preferred_element_type=jnp.float32)
         + b0)
    # Invariant from here on: h[:, hidden] == 1, h[:, hidden+1:] == 0.

    # Hidden [Linear + ReLU] blocks; bias is row `hidden` of each weight block,
    # and column `hidden` is e_hidden so the constant-1 lane survives the ReLU.
    for l in range(layers):
        base = blk0 + l * HP
        w = slab_ref[base:base + HP, :]                   # (128, 128) lane-dense
        h = jnp.maximum(jnp.dot(h, w, preferred_element_type=jnp.float32), 0.0)

    # Output Linear (no activation); bias folded the same way.  Only OUT_PAD
    # lanes are produced so the store matches the narrow output block.
    base = blk0 + layers * HP
    w_o = slab_ref[base:base + HP, 0:OUT_PAD]             # (128, OUT_PAD)
    out = jnp.dot(h, w_o, preferred_element_type=jnp.float32)
    o_ref[...] = out.astype(o_ref.dtype)


def pack_params(params):
    """Pack all Linear weights/biases into one (R, 128) f32 slab.

    Row layout (all block starts are multiples of 8):
      [0 : S_d)                  W_s  (states part of layer-0 weight), cols 0:H
      [c_off : c_off+C_d)        W_c  (controls part),                 cols 0:H
      [b_off]                    b0, cols 0:H ; col H = 1.0 (constant-1 lane)
      for l in range(L): base = blk0 + l*HP
        [base : base+H)          hidden weight l, cols 0:H
        [base+H]                 hidden bias  l, cols 0:H ; col H = 1.0
      base = blk0 + L*HP
        [base : base+H)          output weight, cols 0:S_d
        [base+H]                 output bias,   cols 0:S_d
    All other entries are zero (required for the constant-1-lane bias folding
    and for the zero-padded output columns).
    """
    w0, b0 = params["w0"], params["b0"]
    wh, bh = params["wh"], params["bh"]
    wo, bo = params["wo"], params["bo"]
    in_dim, hidden = w0.shape
    layers = wh.shape[0]
    state_dims = wo.shape[1]
    control_dims = in_dim - state_dims
    assert hidden + 1 <= HP and hidden + 1 <= LANE
    assert state_dims <= OUT_PAD

    c_off, b_off, blk0 = _layout(state_dims, control_dims)
    rows = blk0 + (layers + 1) * HP

    slab = jnp.zeros((rows, LANE), jnp.float32)
    slab = slab.at[0:state_dims, 0:hidden].set(w0[:state_dims].astype(jnp.float32))
    slab = slab.at[c_off:c_off + control_dims, 0:hidden].set(
        w0[state_dims:].astype(jnp.float32))
    slab = slab.at[b_off, 0:hidden].set(b0.astype(jnp.float32))
    slab = slab.at[b_off, hidden].set(1.0)
    for l in range(layers):
        base = blk0 + l * HP
        slab = slab.at[base:base + hidden, 0:hidden].set(wh[l].astype(jnp.float32))
        slab = slab.at[base + hidden, 0:hidden].set(bh[l].astype(jnp.float32))
        slab = slab.at[base + hidden, hidden].set(1.0)
    base = blk0 + layers * HP
    slab = slab.at[base:base + hidden, 0:state_dims].set(wo.astype(jnp.float32))
    slab = slab.at[base + hidden, 0:state_dims].set(bo.astype(jnp.float32))
    return slab


def neural_ode_forward(states, control_inputs, slab, *,
                       state_dims=STATE_DIMS, control_dims=CONTROL_DIMS,
                       layers=NUM_LAYERS, block_b=1024,
                       io_dtype=jnp.float32, vmem_limit_bytes=None):
    """Pallas implementation of NeuralODE.forward.

    states:         (B, S_d) or (S_d,)
    control_inputs: (B, C_d) or (C_d,)
    slab:           packed parameters from pack_params()
    io_dtype:       dtype of the HBM<->VMEM I/O (f32 or bf16); compute is f32
    returns:        (B, S_d) or (S_d,) matching the input rank
    """
    squeeze = states.ndim == 1
    if squeeze:
        states = states[None, :]
        control_inputs = control_inputs[None, :]

    io_dtype = jnp.dtype(io_dtype)
    states = states.astype(io_dtype)
    control_inputs = control_inputs.astype(io_dtype)
    B = states.shape[0]

    # Batch tiling.  Granularity follows the native sublane packing of the I/O
    # dtype (8 rows for f32, 16 for bf16) so every block stays tileable.
    gran = max(8, 32 // io_dtype.itemsize)
    b8 = _round_up(B, gran)
    block_b = max(_round_up(block_b, gran), gran)
    if b8 <= block_b:
        if b8 >= 2 * _MIN_SPLIT_ROWS:
            # Split into >=2 grid steps so both v7x TensorCores get work.
            tb = _round_up((b8 + 1) // 2, gran)
        else:
            tb = b8
    else:
        tb = block_b
    b_pad = _round_up(b8, tb)
    if b_pad != B:
        states = jnp.pad(states, ((0, b_pad - B), (0, 0)))
        control_inputs = jnp.pad(control_inputs, ((0, b_pad - B), (0, 0)))

    kernel = functools.partial(
        _neural_ode_kernel,
        state_dims=state_dims, control_dims=control_dims, layers=layers)

    # Rough VMEM footprint: lane-padded, double-buffered I/O blocks + slab +
    # live f32 activations.  Only raise the scoped limit when the 16 MiB v5e
    # default would not cover it; cap at 64 MiB so the config also fits v7x.
    slab_bytes = slab.size * slab.dtype.itemsize
    est = (2 * 3 * tb * LANE * io_dtype.itemsize    # in/out blocks, dbl-buffered
           + 2 * slab_bytes                         # resident weight slab
           + 4 * tb * LANE * 4)                     # live f32 activations
    compiler_kwargs = dict(dimension_semantics=("parallel",))
    limit = vmem_limit_bytes
    if limit is None and est > (16 << 20):
        limit = int(min(est + (8 << 20), 64 << 20))
    if limit is not None:
        compiler_kwargs["vmem_limit_bytes"] = int(limit)

    out = pl.pallas_call(
        kernel,
        out_shape=jax.ShapeDtypeStruct((b_pad, OUT_PAD), io_dtype),
        grid=(b_pad // tb,),
        in_specs=[
            pl.BlockSpec((tb, state_dims), lambda i: (i, 0)),
            pl.BlockSpec((tb, control_dims), lambda i: (i, 0)),
            # Constant block index -> the ~400 KiB weight slab is DMA'd once
            # and stays resident in VMEM across all grid steps.
            pl.BlockSpec(slab.shape, lambda i: (0, 0)),
        ],
        out_specs=pl.BlockSpec((tb, OUT_PAD), lambda i: (i, 0)),
        compiler_params=pltpu.CompilerParams(**compiler_kwargs),
    )(states, control_inputs, slab)

    out = out[:B, :state_dims]
    return out[0] if squeeze else out


def init_params(key, state_dims=STATE_DIMS, control_dims=CONTROL_DIMS,
                layers=NUM_LAYERS, hidden_dims=HIDDEN_DIMS):
    """PyTorch nn.Linear-style init: U(-1/sqrt(fan_in), 1/sqrt(fan_in)).

    Weights are stored as (in_features, out_features) so the kernel does x @ W.
    """
    d_in = state_dims + control_dims
    keys = jax.random.split(key, 2 * (layers + 2))

    def lin(kw, kb, fan_in, fan_out):
        bound = 1.0 / jnp.sqrt(jnp.float32(fan_in))
        w = jax.random.uniform(kw, (fan_in, fan_out), jnp.float32, -bound, bound)
        b = jax.random.uniform(kb, (fan_out,), jnp.float32, -bound, bound)
        return w, b

    w0, b0 = lin(keys[0], keys[1], d_in, hidden_dims)
    wh_list, bh_list = [], []
    for l in range(layers):
        w, b = lin(keys[2 + 2 * l], keys[3 + 2 * l], hidden_dims, hidden_dims)
        wh_list.append(w)
        bh_list.append(b)
    wo, bo = lin(keys[2 + 2 * layers], keys[3 + 2 * layers],
                 hidden_dims, state_dims)

    return {
        "w0": w0, "b0": b0,
        "wh": jnp.stack(wh_list, axis=0),   # (L, H, H)
        "bh": jnp.stack(bh_list, axis=0),   # (L, H)
        "wo": wo, "bo": bo,
    }


def _reference_forward(states, control_inputs, params):
    """Pure-JAX reference matching the PyTorch module."""
    x = jnp.concatenate([states, control_inputs], axis=-1).astype(jnp.float32)
    h = x @ params["w0"] + params["b0"]
    for l in range(params["wh"].shape[0]):
        h = jnp.maximum(h @ params["wh"][l] + params["bh"][l], 0.0)
    return h @ params["wo"] + params["bo"]


if __name__ == "__main__":
    root = jax.random.PRNGKey(0)
    k_params, k_s, k_c, k_s2, k_c2 = jax.random.split(root, 5)

    params = init_params(k_params)
    slab = pack_params(params)

    # Small batched RHS evaluation (typical NeuralODE call).
    B = 8
    states = jax.random.normal(k_s, (B, STATE_DIMS), jnp.float32)
    controls = jax.random.normal(k_c, (B, CONTROL_DIMS), jnp.float32)
    out = jax.block_until_ready(neural_ode_forward(states, controls, slab))
    ref = _reference_forward(states, controls, params)
    assert out.shape == (B, STATE_DIMS), out.shape
    assert jnp.allclose(out, ref, atol=1e-4, rtol=1e-4), (
        f"max abs err {jnp.max(jnp.abs(out - ref))}")

    # Unbatched (S_d,) path supported by the PyTorch module.
    out1 = jax.block_until_ready(neural_ode_forward(states[0], controls[0], slab))
    assert out1.shape == (STATE_DIMS,), out1.shape
    assert jnp.allclose(out1, ref[0], atol=1e-4, rtol=1e-4)

    # A batch just large enough to run >=2 grid steps (tiled / two-core path).
    B2 = 384
    s2 = jax.random.normal(k_s2, (B2, STATE_DIMS), jnp.float32)
    c2 = jax.random.normal(k_c2, (B2, CONTROL_DIMS), jnp.float32)
    out2 = jax.block_until_ready(neural_ode_forward(s2, c2, slab))
    ref2 = _reference_forward(s2, c2, params)
    assert out2.shape == (B2, STATE_DIMS), out2.shape
    assert jnp.allclose(out2, ref2, atol=1e-4, rtol=1e-4), (
        f"max abs err {jnp.max(jnp.abs(out2 - ref2))}")

    # Optional bf16 I/O path (halves the dominant HBM traffic); compute stays
    # f32 inside the kernel, so only input/output quantization differs.
    out_bf = jax.block_until_ready(
        neural_ode_forward(s2, c2, slab, io_dtype=jnp.bfloat16))
    assert out_bf.shape == (B2, STATE_DIMS), out_bf.shape
    assert jnp.allclose(out_bf.astype(jnp.float32), ref2, atol=5e-2, rtol=5e-2), (
        f"max abs err {jnp.max(jnp.abs(out_bf.astype(jnp.float32) - ref2))}")

    print("KERNEL_OK")
</pallas_src>

<mosaic_0001>
module attributes {stable_mosaic.version = 11 : i64} {
  func.func @_neural_ode_kernel(%arg0: i32, %arg1: memref<8x6xf32, #tpu.memory_space<vmem>>, %arg2: memref<8x2xf32, #tpu.memory_space<vmem>>, %arg3: memref<792x128xf32, #tpu.memory_space<vmem>>, %arg4: memref<8x8xf32, #tpu.memory_space<vmem>>) attributes {dimension_semantics = [#tpu.dimension_semantics<parallel>], iteration_bounds = array<i64: 1>, scalar_prefetch = 0 : i64, scratch_operands = 0 : i64, tpu.core_type = #tpu.core_type<tc>, window_params = [{transform_indices = @transform_0, window_bounds = array<i64: 8, 6>}, {transform_indices = @transform_1, window_bounds = array<i64: 8, 2>}, {pipeline_mode = #tpu.pipeline_mode<synchronous>, transform_indices = @transform_2, window_bounds = array<i64: 792, 128>}, {transform_indices = @transform_3, window_bounds = array<i64: 8, 8>}]} {
    %c0 = arith.constant 0 : index
    %c0_0 = arith.constant 0 : index
    %0 = vector.load %arg1[%c0, %c0_0] : memref<8x6xf32, #tpu.memory_space<vmem>>, vector<8x6xf32>
    %c0_1 = arith.constant 0 : index
    %c0_2 = arith.constant 0 : index
    %1 = vector.load %arg2[%c0_1, %c0_2] : memref<8x2xf32, #tpu.memory_space<vmem>>, vector<8x2xf32>
    %c0_3 = arith.constant 0 : index
    %c0_4 = arith.constant 0 : index
    %2 = vector.load %arg3[%c0_3, %c0_4] : memref<792x128xf32, #tpu.memory_space<vmem>>, vector<6x128xf32>
    %c8 = arith.constant 8 : index
    %c0_5 = arith.constant 0 : index
    %3 = vector.load %arg3[%c8, %c0_5] : memref<792x128xf32, #tpu.memory_space<vmem>>, vector<2x128xf32>
    %c16 = arith.constant 16 : index
    %c0_6 = arith.constant 0 : index
    %4 = vector.load %arg3[%c16, %c0_6] : memref<792x128xf32, #tpu.memory_space<vmem>>, vector<1x128xf32>
    %cst = arith.constant dense<0.000000e+00> : vector<8x128xf32>
    %5 = tpu.matmul %0, %2, %cst {dimension_numbers = #tpu.dot_dimension_numbers<[1], [0], [0], [1], [0, 0, 1, 1], [], []>} : vector<8x6xf32>, vector<6x128xf32>, vector<8x128xf32> -> vector<8x128xf32>
    %cst_7 = arith.constant dense<0.000000e+00> : vector<8x128xf32>
    %6 = tpu.matmul %1, %3, %cst_7 {dimension_numbers = #tpu.dot_dimension_numbers<[1], [0], [0], [1], [0, 0, 1, 1], [], []>} : vector<8x2xf32>, vector<2x128xf32>, vector<8x128xf32> -> vector<8x128xf32>
    %7 = arith.addf %5, %6 : vector<8x128xf32>
    %8 = vector.broadcast %4 : vector<1x128xf32> to vector<8x128xf32>
    %9 = arith.addf %7, %8 : vector<8x128xf32>
    %c24 = arith.constant 24 : index
    %c0_8 = arith.constant 0 : index
    %10 = vector.load %arg3[%c24, %c0_8] : memref<792x128xf32, #tpu.memory_space<vmem>>, vector<128x128xf32>
    %cst_9 = arith.constant dense<0.000000e+00> : vector<8x128xf32>
    %11 = tpu.matmul %9, %10, %cst_9 {dimension_numbers = #tpu.dot_dimension_numbers<[1], [0], [0], [1], [0, 0, 1, 1], [], []>} : vector<8x128xf32>, vector<128x128xf32>, vector<8x128xf32> -> vector<8x128xf32>
    %cst_10 = arith.constant 0.000000e+00 : f32
    %12 = vector.broadcast %cst_10 : f32 to vector<8x128xf32>
    %13 = arith.maximumf %11, %12 : vector<8x128xf32>
    %c152 = arith.constant 152 : index
    %c0_11 = arith.constant 0 : index
    %14 = vector.load %arg3[%c152, %c0_11] : memref<792x128xf32, #tpu.memory_space<vmem>>, vector<128x128xf32>
    %cst_12 = arith.constant dense<0.000000e+00> : vector<8x128xf32>
    %15 = tpu.matmul %13, %14, %cst_12 {dimension_numbers = #tpu.dot_dimension_numbers<[1], [0], [0], [1], [0, 0, 1, 1], [], []>} : vector<8x128xf32>, vector<128x128xf32>, vector<8x128xf32> -> vector<8x128xf32>
    %cst_13 = arith.constant 0.000000e+00 : f32
    %16 = vector.broadcast %cst_13 : f32 to vector<8x128xf32>
    %17 = arith.maximumf %15, %16 : vector<8x128xf32>
    %c280 = arith.constant 280 : index
    %c0_14 = arith.constant 0 : index
    %18 = vector.load %arg3[%c280, %c0_14] : memref<792x128xf32, #tpu.memory_space<vmem>>, vector<128x128xf32>
    %cst_15 = arith.constant dense<0.000000e+00> : vector<8x128xf32>
    %19 = tpu.matmul %17, %18, %cst_15 {dimension_numbers = #tpu.dot_dimension_numbers<[1], [0], [0], [1], [0, 0, 1, 1], [], []>} : vector<8x128xf32>, vector<128x128xf32>, vector<8x128xf32> -> vector<8x128xf32>
    %cst_16 = arith.constant 0.000000e+00 : f32
    %20 = vector.broadcast %cst_16 : f32 to vector<8x128xf32>
    %21 = arith.maximumf %19, %20 : vector<8x128xf32>
    %c408 = arith.constant 408 : index
    %c0_17 = arith.constant 0 : index
    %22 = vector.load %arg3[%c408, %c0_17] : memref<792x128xf32, #tpu.memory_space<vmem>>, vector<128x128xf32>
    %cst_18 = arith.constant dense<0.000000e+00> : vector<8x128xf32>
    %23 = tpu.matmul %21, %22, %cst_18 {dimension_numbers = #tpu.dot_dimension_numbers<[1], [0], [0], [1], [0, 0, 1, 1], [], []>} : vector<8x128xf32>, vector<128x128xf32>, vector<8x128xf32> -> vector<8x128xf32>
    %cst_19 = arith.constant 0.000000e+00 : f32
    %24 = vector.broadcast %cst_19 : f32 to vector<8x128xf32>
    %25 = arith.maximumf %23, %24 : vector<8x128xf32>
    %c536 = arith.constant 536 : index
    %c0_20 = arith.constant 0 : index
    %26 = vector.load %arg3[%c536, %c0_20] : memref<792x128xf32, #tpu.memory_space<vmem>>, vector<128x128xf32>
    %cst_21 = arith.constant dense<0.000000e+00> : vector<8x128xf32>
    %27 = tpu.matmul %25, %26, %cst_21 {dimension_numbers = #tpu.dot_dimension_numbers<[1], [0], [0], [1], [0, 0, 1, 1], [], []>} : vector<8x128xf32>, vector<128x128xf32>, vector<8x128xf32> -> vector<8x128xf32>
    %cst_22 = arith.constant 0.000000e+00 : f32
    %28 = vector.broadcast %cst_22 : f32 to vector<8x128xf32>
    %29 = arith.maximumf %27, %28 : vector<8x128xf32>
    %c664 = arith.constant 664 : index
    %c0_23 = arith.constant 0 : index
    %30 = vector.load %arg3[%c664, %c0_23] : memref<792x128xf32, #tpu.memory_space<vmem>>, vector<128x8xf32>
    %cst_24 = arith.constant dense<0.000000e+00> : vector<8x8xf32>
    %31 = tpu.matmul %29, %30, %cst_24 {dimension_numbers = #tpu.dot_dimension_numbers<[1], [0], [0], [1], [0, 0, 1, 1], [], []>} : vector<8x128xf32>, vector<128x8xf32>, vector<8x8xf32> -> vector<8x8xf32>
    %c0_25 = arith.constant 0 : index
    %c0_26 = arith.constant 0 : index
    %32 = vector.load %arg4[%c0_25, %c0_26] : memref<8x8xf32, #tpu.memory_space<vmem>>, vector<8x8xf32>
    tpu.vector_store %arg4[%c0_25, %c0_26], %31 {strides = array<i32>} : memref<8x8xf32, #tpu.memory_space<vmem>>, vector<8x8xf32>,
    return
  }
  func.func @transform_0(%arg0: i32) -> (i32, i32) {
    %c0_i32 = arith.constant 0 : i32
    %c0_i32_0 = arith.constant 0 : i32
    return %arg0, %c0_i32 : i32, i32
  }
  func.func @transform_1(%arg0: i32) -> (i32, i32) {
    %c0_i32 = arith.constant 0 : i32
    %c0_i32_0 = arith.constant 0 : i32
    return %arg0, %c0_i32 : i32, i32
  }
  func.func @transform_2(%arg0: i32) -> (i32, i32) {
    %c0_i32 = arith.constant 0 : i32
    %c0_i32_0 = arith.constant 0 : i32
    %c0_i32_1 = arith.constant 0 : i32
    return %c0_i32, %c0_i32_0 : i32, i32
  }
  func.func @transform_3(%arg0: i32) -> (i32, i32) {
    %c0_i32 = arith.constant 0 : i32
    %c0_i32_0 = arith.constant 0 : i32
    return %arg0, %c0_i32 : i32, i32
  }
}

</mosaic_0001>

<llo_original>
// kernel: tpu_custom_call.1
$region0: #{tpu_custom_call.1}
  #allocation0 [shape = 'u32[]', space=smem, size = 0x4, offset = 0x4, fixed_abs, tag = 'smem constant byte address 0x4 - core index']
  #allocation1 [shape = 'u32[144,128]{1,0:T(1,128)}', space=vmem, size = 0x12000, scoped, tag = 'internal scratch']
  %s0 = inlined_call_operand.vmem [shape: f32[8,6], index: 0, kind: input, shape index: {}]
  %s1 = inlined_call_operand.vmem [shape: f32[8,2], index: 1, kind: input, shape index: {}]
  %s2 = inlined_call_operand.hbm [shape: f32[792,128], index: 2, kind: input, shape index: {}]
  %s3 = inlined_call_operand.hbm [shape: f32[8,8], index: 3, kind: output, shape index: {}]
  %s4 = sld [smem:[#allocation0]]
  $region26: #{tpu_custom_call.1} parent=0
    _
  %s6 = ssub.s32 1, %s4
  %s7 = scalar_select 0, %s6, %s4
  $region1: #{tpu_custom_call.1} parent=0
    #allocation2 [shape = 'u8[405504]{0}', space=vmem, size = 0x63000, scoped, tag = 'input window, operand 2, single buffered']
    #allocation3 [shape = 's32[1]{0}', space=sflag, size = 0x4, scoped, tag = 'scoped memory for tpu_custom_call.1']
    #allocation4 [shape = 's32[1]{0}', space=sflag, size = 0x4, scoped, tag = 'scoped memory for tpu_custom_call.1']
    #allocation5 [shape = 'u8[4096]{0}', space=vmem, size = 0x1000, scoped, tag = 'output window, operand 0, single buffered']
    %8 = vsyncpa [#allocation3], 0
    %9 = vsyncpa [#allocation4], 0
    // Predicated region
    $region2: #{tpu_custom_call.1} parent=1 // pred_check
      _
    $region3: #{tpu_custom_call.1} parent=1 // pred_check_branch
      %11 = sbr.rel (0) target = $region5
    $region4: #{tpu_custom_call.1} parent=1 // pred_region
      _
    $region5: #{tpu_custom_call.1} parent=1 // pred_fallthru
      _
    // Predicated region
    $region6: #{tpu_custom_call.1} parent=1 // pred_check
      _
    $region7: #{tpu_custom_call.1} parent=1 // pred_check_branch
      %13 = sbr.rel (0) target = $region9
    $region8: #{tpu_custom_call.1} parent=1 // pred_region
      _
    $region9: #{tpu_custom_call.1} parent=1 // pred_fallthru
      _
    // Predicated region
    $region10: #{tpu_custom_call.1} parent=1 // pred_check
      _
    $region11: #{tpu_custom_call.1} parent=1 // pred_check_branch
      %15 = sbr.rel (0) target = $region13
    $region12: #{tpu_custom_call.1} parent=1 // pred_region
      %s17 = ssub.s32 12672, 12672
      %18 = vsyncadd [#allocation3], %s17
      %s19 = sshll.u32 [#allocation2], 4
      %s20 = int_to_ptr.vmem [resolvable:$true] %s19
      %25 = dma.hbm_to_vmem [thread:$0]  %s2, 12672, %s20, [#allocation3], 128, 128, 8
    $region13: #{tpu_custom_call.1} parent=1 // pred_fallthru
      _
    // Predicated region
    $region14: #{tpu_custom_call.1} parent=1 // pred_check
      _
    $region15: #{tpu_custom_call.1} parent=1 // pred_check_branch
      %27 = sbr.rel (0) target = $region17
    $region16: #{tpu_custom_call.1} parent=1 // pred_region
      %28 = dma.done [#allocation3], 12672
    $region17: #{tpu_custom_call.1} parent=1 // pred_fallthru
      _
    %v29 = vld [vmem:[%s0] sm:$0xff]
    %v30 = vld [vmem:[%s1] sm:$0xff]
    %v31 = vld [vmem:[#allocation2] sm:$0x3f]
    %v32 = vld [vmem:[#allocation2 + $0x8] sm:$0x3]
    %v33 = vld [vmem:[#allocation2 + $0x10] sm:$0x1]
    %vm34 = vcmask 15360
    %v36 = vsel %vm34, %v30, 0
    %vm38 = vcmask 1041408
    %v40 = vsel %vm38, %v32, 0
    %42 = vmatprep.subr.mxu0 0.0
    %43 = vmatpush1.msra.mxu0 0.0
    %44 = vmatprep.subr.mxu0 0.0
    %45 = vmatpush1.msra.mxu0 0.0
    %46 = vmatprep.subr.mxu0 0.0
    %47 = vmatpush1.msra.mxu0 0.0
    %48 = vmatprep.subr.mxu0 0.0
    %49 = vmatpush1.msra.mxu0 0.0
    %50 = vmatprep.subr.mxu0 0.0
    %51 = vmatpush1.msra.mxu0 0.0
    %52 = vmatprep.subr.mxu0 0.0
    %53 = vmatpush1.msra.mxu0 0.0
    %54 = vmatprep.subr.mxu0 0.0
    %55 = vmatpush1.msra.mxu0 0.0
    %56 = vmatprep.subr.mxu0 0.0
    %57 = vmatpush1.msra.mxu0 0.0
    %58 = vmatprep.subr.mxu0 0.0
    %59 = vmatpush1.msra.mxu0 0.0
    %60 = vmatprep.subr.mxu0 0.0
    %61 = vmatpush1.msra.mxu0 0.0
    %62 = vmatprep.subr.mxu0 0.0
    %63 = vmatpush1.msra.mxu0 0.0
    %64 = vmatprep.subr.mxu0 0.0
    %65 = vmatpush1.msra.mxu0 0.0
    %66 = vmatprep.subr.mxu0 0.0
    %67 = vmatpush1.msra.mxu0 0.0
    %68 = vmatprep.subr.mxu0 0.0
    %69 = vmatpush1.msra.mxu0 0.0
    %70 = vmatprep.subr.mxu0 0.0
    %71 = vmatpush1.msra.mxu0 0.0
    %72 = vmatprep.subr.mxu0 0.0
    %73 = vmatpush1.msra.mxu0 %v40
    %74 = vmatprep.subr.mxu0 0.0
    %75 = vmatpush2.msra.mxu0 0.0
    %76 = vmatprep.subr.mxu0 0.0
    %77 = vmatpush2.msra.mxu0 0.0
    %78 = vmatprep.subr.mxu0 0.0
    %79 = vmatpush2.msra.mxu0 0.0
    %80 = vmatprep.subr.mxu0 0.0
    %81 = vmatpush2.msra.mxu0 0.0
    %82 = vmatprep.subr.mxu0 0.0
    %83 = vmatpush2.msra.mxu0 0.0
    %84 = vmatprep.subr.mxu0 0.0
    %85 = vmatpush2.msra.mxu0 0.0
    %86 = vmatprep.subr.mxu0 0.0
    %87 = vmatpush2.msra.mxu0 0.0
    %88 = vmatprep.subr.mxu0 0.0
    %89 = vmatpush2.msra.mxu0 0.0
    %90 = vmatprep.subr.mxu0 0.0
    %91 = vmatpush2.msra.mxu0 0.0
    %92 = vmatprep.subr.mxu0 0.0
    %93 = vmatpush2.msra.mxu0 0.0
    %94 = vmatprep.subr.mxu0 0.0
    %95 = vmatpush2.msra.mxu0 0.0
    %96 = vmatprep.subr.mxu0 0.0
    %97 = vmatpush2.msra.mxu0 0.0
    %98 = vmatprep.subr.mxu0 0.0
    %99 = vmatpush2.msra.mxu0 0.0
    %100 = vmatprep.subr.mxu0 0.0
    %101 = vmatpush2.msra.mxu0 0.0
    %102 = vmatprep.subr.mxu0 0.0
    %103 = vmatpush2.msra.mxu0 0.0
    %104 = vmatprep.subr.mxu0 0.0
    %105 = vmatpush2.msra.mxu0 0.0
    %106 = vmatprep.mubr.f32.mxu0 0.0
    %107 = vmatmul.mubr.f32.gmra.mxu0 %v36
    %v108 = vpop.f32.mrf.mxu0
    %v109 = vadd.f32 0.0, %v108
    %v110 = vpop.f32.mrf.mxu0
    %111 = vdwg.mxu0
    %vm112 = vcmask 48128
    %v114 = vsel %vm112, %v29, 0
    %vm116 = vcmask 1045504
    %v118 = vsel %vm116, %v31, 0
    %120 = vmatprep.subr.mxu0 0.0
    %121 = vmatpush1.msra.mxu0 0.0
    %122 = vmatprep.subr.mxu0 0.0
    %123 = vmatpush1.msra.mxu0 0.0
    %124 = vmatprep.subr.mxu0 0.0
    %125 = vmatpush1.msra.mxu0 0.0
    %126 = vmatprep.subr.mxu0 0.0
    %127 = vmatpush1.msra.mxu0 0.0
    %128 = vmatprep.subr.mxu0 0.0
    %129 = vmatpush1.msra.mxu0 0.0
    %130 = vmatprep.subr.mxu0 0.0
    %131 = vmatpush1.msra.mxu0 0.0
    %132 = vmatprep.subr.mxu0 0.0
    %133 = vmatpush1.msra.mxu0 0.0
    %134 = vmatprep.subr.mxu0 0.0
    %135 = vmatpush1.msra.mxu0 0.0
    %136 = vmatprep.subr.mxu0 0.0
    %137 = vmatpush1.msra.mxu0 0.0
    %138 = vmatprep.subr.mxu0 0.0
    %139 = vmatpush1.msra.mxu0 0.0
    %140 = vmatprep.subr.mxu0 0.0
    %141 = vmatpush1.msra.mxu0 0.0
    %142 = vmatprep.subr.mxu0 0.0
    %143 = vmatpush1.msra.mxu0 0.0
    %144 = vmatprep.subr.mxu0 0.0
    %145 = vmatpush1.msra.mxu0 0.0
    %146 = vmatprep.subr.mxu0 0.0
    %147 = vmatpush1.msra.mxu0 0.0
    %148 = vmatprep.subr.mxu0 0.0
    %149 = vmatpush1.msra.mxu0 0.0
    %150 = vmatprep.subr.mxu0 0.0
    %151 = vmatpush1.msra.mxu0 %v118
    %152 = vmatprep.subr.mxu0 0.0
    %153 = vmatpush2.msra.mxu0 0.0
    %154 = vmatprep.subr.mxu0 0.0
    %155 = vmatpush2.msra.mxu0 0.0
    %156 = vmatprep.subr.mxu0 0.0
    %157 = vmatpush2.msra.mxu0 0.0
    %158 = vmatprep.subr.mxu0 0.0
    %159 = vmatpush2.msra.mxu0 0.0
    %160 = vmatprep.subr.mxu0 0.0
    %161 = vmatpush2.msra.mxu0 0.0
    %162 = vmatprep.subr.mxu0 0.0
    %163 = vmatpush2.msra.mxu0 0.0
    %164 = vmatprep.subr.mxu0 0.0
    %165 = vmatpush2.msra.mxu0 0.0
    %166 = vmatprep.subr.mxu0 0.0
    %167 = vmatpush2.msra.mxu0 0.0
    %168 = vmatprep.subr.mxu0 0.0
    %169 = vmatpush2.msra.mxu0 0.0
    %170 = vmatprep.subr.mxu0 0.0
    %171 = vmatpush2.msra.mxu0 0.0
    %172 = vmatprep.subr.mxu0 0.0
    %173 = vmatpush2.msra.mxu0 0.0
    %174 = vmatprep.subr.mxu0 0.0
    %175 = vmatpush2.msra.mxu0 0.0
    %176 = vmatprep.subr.mxu0 0.0
    %177 = vmatpush2.msra.mxu0 0.0
    %178 = vmatprep.subr.mxu0 0.0
    %179 = vmatpush2.msra.mxu0 0.0
    %180 = vmatprep.subr.mxu0 0.0
    %181 = vmatpush2.msra.mxu0 0.0
    %182 = vmatprep.subr.mxu0 0.0
    %183 = vmatpush2.msra.mxu0 0.0
    %184 = vmatprep.mubr.f32.mxu0 0.0
    %185 = vmatmul.mubr.f32.gmra.mxu0 %v114
    %v186 = vpop.f32.mrf.mxu0
    %v187 = vadd.f32 %v109, %v186
    %v188 = vpop.f32.mrf.mxu0
    %189 = vdwg.mxu0
    %v190 = vlaneseq
    %v191 = vshrl.u32 %v190, 7
    %v192 = vsub.s32 0, %v191
    %v193 = vrot.slane %v33, %v192
    %v194 = vadd.f32 %v187, %v193
    %v195 = vld [vmem:[#allocation2 + $0x18] sm:$0xff]
    %v196 = vld [vmem:[#allocation2 + $0x20] sm:$0xff]
    %v197 = vld [vmem:[#allocation2 + $0x28] sm:$0xff]
    %v198 = vld [vmem:[#allocation2 + $0x30] sm:$0xff]
    %v199 = vld [vmem:[#allocation2 + $0x38] sm:$0xff]
    %v200 = vld [vmem:[#allocation2 + $0x40] sm:$0xff]
    %v201 = vld [vmem:[#allocation2 + $0x48] sm:$0xff]
    %v202 = vld [vmem:[#allocation2 + $0x50] sm:$0xff]
    %v203 = vld [vmem:[#allocation2 + $0x58] sm:$0xff]
    %v204 = vld [vmem:[#allocation2 + $0x60] sm:$0xff]
    %v205 = vld [vmem:[#allocation2 + $0x68] sm:$0xff]
    %v206 = vld [vmem:[#allocation2 + $0x70] sm:$0xff]
    %v207 = vld [vmem:[#allocation2 + $0x78] sm:$0xff]
    %v208 = vld [vmem:[#allocation2 + $0x80] sm:$0xff]
    %v209 = vld [vmem:[#allocation2 + $0x88] sm:$0xff]
    %v210 = vld [vmem:[#allocation2 + $0x90] sm:$0xff]
    %211 = vmatprep.subr.mxu0 0.0
    %212 = vmatpush1.msra.mxu0 %v210
    %213 = vmatprep.subr.mxu0 0.0
    %214 = vmatpush1.msra.mxu0 %v209
    %215 = vmatprep.subr.mxu0 0.0
    %216 = vmatpush1.msra.mxu0 %v208
    %217 = vmatprep.subr.mxu0 0.0
    %218 = vmatpush1.msra.mxu0 %v207
    %219 = vmatprep.subr.mxu0 0.0
    %220 = vmatpush1.msra.mxu0 %v206
    %221 = vmatprep.subr.mxu0 0.0
    %222 = vmatpush1.msra.mxu0 %v205
    %223 = vmatprep.subr.mxu0 0.0
    %224 = vmatpush1.msra.mxu0 %v204
    %225 = vmatprep.subr.mxu0 0.0
    %226 = vmatpush1.msra.mxu0 %v203
    %227 = vmatprep.subr.mxu0 0.0
    %228 = vmatpush1.msra.mxu0 %v202
    %229 = vmatprep.subr.mxu0 0.0
    %230 = vmatpush1.msra.mxu0 %v201
    %231 = vmatprep.subr.mxu0 0.0
    %232 = vmatpush1.msra.mxu0 %v200
    %233 = vmatprep.subr.mxu0 0.0
    %234 = vmatpush1.msra.mxu0 %v199
    %235 = vmatprep.subr.mxu0 0.0
    %236 = vmatpush1.msra.mxu0 %v198
    %237 = vmatprep.subr.mxu0 0.0
    %238 = vmatpush1.msra.mxu0 %v197
    %239 = vmatprep.subr.mxu0 0.0
    %240 = vmatpush1.msra.mxu0 %v196
    %241 = vmatprep.subr.mxu0 0.0
    %242 = vmatpush1.msra.mxu0 %v195
    %243 = vmatprep.subr.mxu0 0.0
    %244 = vmatpush2.msra.mxu0 0.0
    %245 = vmatprep.subr.mxu0 0.0
    %246 = vmatpush2.msra.mxu0 0.0
    %247 = vmatprep.subr.mxu0 0.0
    %248 = vmatpush2.msra.mxu0 0.0
    %249 = vmatprep.subr.mxu0 0.0
    %250 = vmatpush2.msra.mxu0 0.0
    %251 = vmatprep.subr.mxu0 0.0
    %252 = vmatpush2.msra.mxu0 0.0
    %253 = vmatprep.subr.mxu0 0.0
    %254 = vmatpush2.msra.mxu0 0.0
    %255 = vmatprep.subr.mxu0 0.0
    %256 = vmatpush2.msra.mxu0 0.0
    %257 = vmatprep.subr.mxu0 0.0
    %258 = vmatpush2.msra.mxu0 0.0
    %259 = vmatprep.subr.mxu0 0.0
    %260 = vmatpush2.msra.mxu0 0.0
    %261 = vmatprep.subr.mxu0 0.0
    %262 = vmatpush2.msra.mxu0 0.0
    %263 = vmatprep.subr.mxu0 0.0
    %264 = vmatpush2.msra.mxu0 0.0
    %265 = vmatprep.subr.mxu0 0.0
    %266 = vmatpush2.msra.mxu0 0.0
    %267 = vmatprep.subr.mxu0 0.0
    %268 = vmatpush2.msra.mxu0 0.0
    %269 = vmatprep.subr.mxu0 0.0
    %270 = vmatpush2.msra.mxu0 0.0
    %271 = vmatprep.subr.mxu0 0.0
    %272 = vmatpush2.msra.mxu0 0.0
    %273 = vmatprep.subr.mxu0 0.0
    %274 = vmatpush2.msra.mxu0 0.0
    %275 = vmatprep.mubr.f32.mxu0 0.0
    %276 = vmatmul.mubr.f32.gmra.mxu0 %v194
    %v277 = vpop.f32.mrf.mxu0
    %v278 = vadd.f32 0.0, %v277
    %v279 = vpop.f32.mrf.mxu0
    %280 = vdwg.mxu0
    %v281 = vmax.f32 %v278, 0.0
    %v282 = vld [vmem:[#allocation2 + $0x98] sm:$0xff]
    %v283 = vld [vmem:[#allocation2 + $0xa0] sm:$0xff]
    %v284 = vld [vmem:[#allocation2 + $0xa8] sm:$0xff]
    %v285 = vld [vmem:[#allocation2 + $0xb0] sm:$0xff]
    %v286 = vld [vmem:[#allocation2 + $0xb8] sm:$0xff]
    %v287 = vld [vmem:[#allocation2 + $0xc0] sm:$0xff]
    %v288 = vld [vmem:[#allocation2 + $0xc8] sm:$0xff]
    %v289 = vld [vmem:[#allocation2 + $0xd0] sm:$0xff]
    %v290 = vld [vmem:[#allocation2 + $0xd8] sm:$0xff]
    %v291 = vld [vmem:[#allocation2 + $0xe0] sm:$0xff]
    %v292 = vld [vmem:[#allocation2 + $0xe8] sm:$0xff]
    %v293 = vld [vmem:[#allocation2 + $0xf0] sm:$0xff]
    %v294 = vld [vmem:[#allocation2 + $0xf8] sm:$0xff]
    %v295 = vld [vmem:[#allocation2 + $0x100] sm:$0xff]
    %v296 = vld [vmem:[#allocation2 + $0x108] sm:$0xff]
    %v297 = vld [vmem:[#allocation2 + $0x110] sm:$0xff]
    %298 = vmatprep.subr.mxu0 0.0
    %299 = vmatpush1.msra.mxu0 %v297
    %300 = vmatprep.subr.mxu0 0.0
    %301 = vmatpush1.msra.mxu0 %v296
    %302 = vmatprep.subr.mxu0 0.0
    %303 = vmatpush1.msra.mxu0 %v295
    %304 = vmatprep.subr.mxu0 0.0
    %305 = vmatpush1.msra.mxu0 %v294
    %306 = vmatprep.subr.mxu0 0.0
    %307 = vmatpush1.msra.mxu0 %v293
    %308 = vmatprep.subr.mxu0 0.0
    %309 = vmatpush1.msra.mxu0 %v292
    %310 = vmatprep.subr.mxu0 0.0
    %311 = vmatpush1.msra.mxu0 %v291
    %312 = vmatprep.subr.mxu0 0.0
    %313 = vmatpush1.msra.mxu0 %v290
    %314 = vmatprep.subr.mxu0 0.0
    %315 = vmatpush1.msra.mxu0 %v289
    %316 = vmatprep.subr.mxu0 0.0
    %317 = vmatpush1.msra.mxu0 %v288
    %318 = vmatprep.subr.mxu0 0.0
    %319 = vmatpush1.msra.mxu0 %v287
    %320 = vmatprep.subr.mxu0 0.0
    %321 = vmatpush1.msra.mxu0 %v286
    %322 = vmatprep.subr.mxu0 0.0
    %323 = vmatpush1.msra.mxu0 %v285
    %324 = vmatprep.subr.mxu0 0.0
    %325 = vmatpush1.msra.mxu0 %v284
    %326 = vmatprep.subr.mxu0 0.0
    %327 = vmatpush1.msra.mxu0 %v283
    %328 = vmatprep.subr.mxu0 0.0
    %329 = vmatpush1.msra.mxu0 %v282
    %330 = vmatprep.subr.mxu0 0.0
    %331 = vmatpush2.msra.mxu0 0.0
    %332 = vmatprep.subr.mxu0 0.0
    %333 = vmatpush2.msra.mxu0 0.0
    %334 = vmatprep.subr.mxu0 0.0
    %335 = vmatpush2.msra.mxu0 0.0
    %336 = vmatprep.subr.mxu0 0.0
    %337 = vmatpush2.msra.mxu0 0.0
    %338 = vmatprep.subr.mxu0 0.0
    %339 = vmatpush2.msra.mxu0 0.0
    %340 = vmatprep.subr.mxu0 0.0
    %341 = vmatpush2.msra.mxu0 0.0
    %342 = vmatprep.subr.mxu0 0.0
    %343 = vmatpush2.msra.mxu0 0.0
    %344 = vmatprep.subr.mxu0 0.0
    %345 = vmatpush2.msra.mxu0 0.0
    %346 = vmatprep.subr.mxu0 0.0
    %347 = vmatpush2.msra.mxu0 0.0
    %348 = vmatprep.subr.mxu0 0.0
    %349 = vmatpush2.msra.mxu0 0.0
    %350 = vmatprep.subr.mxu0 0.0
    %351 = vmatpush2.msra.mxu0 0.0
    %352 = vmatprep.subr.mxu0 0.0
    %353 = vmatpush2.msra.mxu0 0.0
    %354 = vmatprep.subr.mxu0 0.0
    %355 = vmatpush2.msra.mxu0 0.0
    %356 = vmatprep.subr.mxu0 0.0
    %357 = vmatpush2.msra.mxu0 0.0
    %358 = vmatprep.subr.mxu0 0.0
    %359 = vmatpush2.msra.mxu0 0.0
    %360 = vmatprep.subr.mxu0 0.0
    %361 = vmatpush2.msra.mxu0 0.0
    %362 = vmatprep.mubr.f32.mxu0 0.0
    %363 = vmatmul.mubr.f32.gmra.mxu0 %v281
    %v364 = vpop.f32.mrf.mxu0
    %v365 = vadd.f32 0.0, %v364
    %v366 = vpop.f32.mrf.mxu0
    %367 = vdwg.mxu0
    %v368 = vmax.f32 %v365, 0.0
    %v369 = vld [vmem:[#allocation2 + $0x118] sm:$0xff]
    %v370 = vld [vmem:[#allocation2 + $0x120] sm:$0xff]
    %v371 = vld [vmem:[#allocation2 + $0x128] sm:$0xff]
    %v372 = vld [vmem:[#allocation2 + $0x130] sm:$0xff]
    %v373 = vld [vmem:[#allocation2 + $0x138] sm:$0xff]
    %v374 = vld [vmem:[#allocation2 + $0x140] sm:$0xff]
    %v375 = vld [vmem:[#allocation2 + $0x148] sm:$0xff]
    %v376 = vld [vmem:[#allocation2 + $0x150] sm:$0xff]
    %v377 = vld [vmem:[#allocation2 + $0x158] sm:$0xff]
    %v378 = vld [vmem:[#allocation2 + $0x160] sm:$0xff]
    %v379 = vld [vmem:[#allocation2 + $0x168] sm:$0xff]
    %v380 = vld [vmem:[#allocation2 + $0x170] sm:$0xff]
    %v381 = vld [vmem:[#allocation2 + $0x178] sm:$0xff]
    %v382 = vld [vmem:[#allocation2 + $0x180] sm:$0xff]
    %v383 = vld [vmem:[#allocation2 + $0x188] sm:$0xff]
    %v384 = vld [vmem:[#allocation2 + $0x190] sm:$0xff]
    %385 = vmatprep.subr.mxu0 0.0
    %386 = vmatpush1.msra.mxu0 %v384
    %387 = vmatprep.subr.mxu0 0.0
    %388 = vmatpush1.msra.mxu0 %v383
    %389 = vmatprep.subr.mxu0 0.0
    %390 = vmatpush1.msra.mxu0 %v382
    %391 = vmatprep.subr.mxu0 0.0
    %392 = vmatpush1.msra.mxu0 %v381
    %393 = vmatprep.subr.mxu0 0.0
    %394 = vmatpush1.msra.mxu0 %v380
    %395 = vmatprep.subr.mxu0 0.0
    %396 = vmatpush1.msra.mxu0 %v379
    %397 = vmatprep.subr.mxu0 0.0
    %398 = vmatpush1.msra.mxu0 %v378
    %399 = vmatprep.subr.mxu0 0.0
    %400 = vmatpush1.msra.mxu0 %v377
    %401 = vmatprep.subr.mxu0 0.0
    %402 = vmatpush1.msra.mxu0 %v376
    %403 = vmatprep.subr.mxu0 0.0
    %404 = vmatpush1.msra.mxu0 %v375
    %405 = vmatprep.subr.mxu0 0.0
    %406 = vmatpush1.msra.mxu0 %v374
    %407 = vmatprep.subr.mxu0 0.0
    %408 = vmatpush1.msra.mxu0 %v373
    %409 = vmatprep.subr.mxu0 0.0
    %410 = vmatpush1.msra.mxu0 %v372
    %411 = vmatprep.subr.mxu0 0.0
    %412 = vmatpush1.msra.mxu0 %v371
    %413 = vmatprep.subr.mxu0 0.0
    %414 = vmatpush1.msra.mxu0 %v370
    %415 = vmatprep.subr.mxu0 0.0
    %416 = vmatpush1.msra.mxu0 %v369
    %417 = vmatprep.subr.mxu0 0.0
    %418 = vmatpush2.msra.mxu0 0.0
    %419 = vmatprep.subr.mxu0 0.0
    %420 = vmatpush2.msra.mxu0 0.0
    %421 = vmatprep.subr.mxu0 0.0
    %422 = vmatpush2.msra.mxu0 0.0
    %423 = vmatprep.subr.mxu0 0.0
    %424 = vmatpush2.msra.mxu0 0.0
    %425 = vmatprep.subr.mxu0 0.0
    %426 = vmatpush2.msra.mxu0 0.0
    %427 = vmatprep.subr.mxu0 0.0
    %428 = vmatpush2.msra.mxu0 0.0
    %429 = vmatprep.subr.mxu0 0.0
    %430 = vmatpush2.msra.mxu0 0.0
    %431 = vmatprep.subr.mxu0 0.0
    %432 = vmatpush2.msra.mxu0 0.0
    %433 = vmatprep.subr.mxu0 0.0
    %434 = vmatpush2.msra.mxu0 0.0
    %435 = vmatprep.subr.mxu0 0.0
    %436 = vmatpush2.msra.mxu0 0.0
    %437 = vmatprep.subr.mxu0 0.0
    %438 = vmatpush2.msra.mxu0 0.0
    %439 = vmatprep.subr.mxu0 0.0
    %440 = vmatpush2.msra.mxu0 0.0
    %441 = vmatprep.subr.mxu0 0.0
    %442 = vmatpush2.msra.mxu0 0.0
    %443 = vmatprep.subr.mxu0 0.0
    %444 = vmatpush2.msra.mxu0 0.0
    %445 = vmatprep.subr.mxu0 0.0
    %446 = vmatpush2.msra.mxu0 0.0
    %447 = vmatprep.subr.mxu0 0.0
    %448 = vmatpush2.msra.mxu0 0.0
    %449 = vmatprep.mubr.f32.mxu0 0.0
    %450 = vmatmul.mubr.f32.gmra.mxu0 %v368
    %v451 = vpop.f32.mrf.mxu0
    %v452 = vadd.f32 0.0, %v451
    %v453 = vpop.f32.mrf.mxu0
    %454 = vdwg.mxu0
    %v455 = vmax.f32 %v452, 0.0
    %v456 = vld [vmem:[#allocation2 + $0x198] sm:$0xff]
    %v457 = vld [vmem:[#allocation2 + $0x1a0] sm:$0xff]
    %v458 = vld [vmem:[#allocation2 + $0x1a8] sm:$0xff]
    %v459 = vld [vmem:[#allocation2 + $0x1b0] sm:$0xff]
    %v460 = vld [vmem:[#allocation2 + $0x1b8] sm:$0xff]
    %v461 = vld [vmem:[#allocation2 + $0x1c0] sm:$0xff]
    %v462 = vld [vmem:[#allocation2 + $0x1c8] sm:$0xff]
    %v463 = vld [vmem:[#allocation2 + $0x1d0] sm:$0xff]
    %v464 = vld [vmem:[#allocation2 + $0x1d8] sm:$0xff]
    %v465 = vld [vmem:[#allocation2 + $0x1e0] sm:$0xff]
    %v466 = vld [vmem:[#allocation2 + $0x1e8] sm:$0xff]
    %v467 = vld [vmem:[#allocation2 + $0x1f0] sm:$0xff]
    %v468 = vld [vmem:[#allocation2 + $0x1f8] sm:$0xff]
    %v469 = vld [vmem:[#allocation2 + $0x200] sm:$0xff]
    %v470 = vld [vmem:[#allocation2 + $0x208] sm:$0xff]
    %v471 = vld [vmem:[#allocation2 + $0x210] sm:$0xff]
    %472 = vmatprep.subr.mxu0 0.0
    %473 = vmatpush1.msra.mxu0 %v471
    %474 = vmatprep.subr.mxu0 0.0
    %475 = vmatpush1.msra.mxu0 %v470
    %476 = vmatprep.subr.mxu0 0.0
    %477 = vmatpush1.msra.mxu0 %v469
    %478 = vmatprep.subr.mxu0 0.0
    %479 = vmatpush1.msra.mxu0 %v468
    %480 = vmatprep.subr.mxu0 0.0
    %481 = vmatpush1.msra.mxu0 %v467
    %482 = vmatprep.subr.mxu0 0.0
    %483 = vmatpush1.msra.mxu0 %v466
    %484 = vmatprep.subr.mxu0 0.0
    %485 = vmatpush1.msra.mxu0 %v465
    %486 = vmatprep.subr.mxu0 0.0
    %487 = vmatpush1.msra.mxu0 %v464
    %488 = vmatprep.subr.mxu0 0.0
    %489 = vmatpush1.msra.mxu0 %v463
    %490 = vmatprep.subr.mxu0 0.0
    %491 = vmatpush1.msra.mxu0 %v462
    %492 = vmatprep.subr.mxu0 0.0
    %493 = vmatpush1.msra.mxu0 %v461
    %494 = vmatprep.subr.mxu0 0.0
    %495 = vmatpush1.msra.mxu0 %v460
    %496 = vmatprep.subr.mxu0 0.0
    %497 = vmatpush1.msra.mxu0 %v459
    %498 = vmatprep.subr.mxu0 0.0
    %499 = vmatpush1.msra.mxu0 %v458
    %500 = vmatprep.subr.mxu0 0.0
    %501 = vmatpush1.msra.mxu0 %v457
    %502 = vmatprep.subr.mxu0 0.0
    %503 = vmatpush1.msra.mxu0 %v456
    %504 = vmatprep.subr.mxu0 0.0
    %505 = vmatpush2.msra.mxu0 0.0
    %506 = vmatprep.subr.mxu0 0.0
    %507 = vmatpush2.msra.mxu0 0.0
    %508 = vmatprep.subr.mxu0 0.0
    %509 = vmatpush2.msra.mxu0 0.0
    %510 = vmatprep.subr.mxu0 0.0
    %511 = vmatpush2.msra.mxu0 0.0
    %512 = vmatprep.subr.mxu0 0.0
    %513 = vmatpush2.msra.mxu0 0.0
    %514 = vmatprep.subr.mxu0 0.0
    %515 = vmatpush2.msra.mxu0 0.0
    %516 = vmatprep.subr.mxu0 0.0
    %517 = vmatpush2.msra.mxu0 0.0
    %518 = vmatprep.subr.mxu0 0.0
    %519 = vmatpush2.msra.mxu0 0.0
    %520 = vmatprep.subr.mxu0 0.0
    %521 = vmatpush2.msra.mxu0 0.0
    %522 = vmatprep.subr.mxu0 0.0
    %523 = vmatpush2.msra.mxu0 0.0
    %524 = vmatprep.subr.mxu0 0.0
    %525 = vmatpush2.msra.mxu0 0.0
    %526 = vmatprep.subr.mxu0 0.0
    %527 = vmatpush2.msra.mxu0 0.0
    %528 = vmatprep.subr.mxu0 0.0
    %529 = vmatpush2.msra.mxu0 0.0
    %530 = vmatprep.subr.mxu0 0.0
    %531 = vmatpush2.msra.mxu0 0.0
    %532 = vmatprep.subr.mxu0 0.0
    %533 = vmatpush2.msra.mxu0 0.0
    %534 = vmatprep.subr.mxu0 0.0
    %535 = vmatpush2.msra.mxu0 0.0
    %536 = vmatprep.mubr.f32.mxu0 0.0
    %537 = vmatmul.mubr.f32.gmra.mxu0 %v455
    %v538 = vpop.f32.mrf.mxu0
    %v539 = vadd.f32 0.0, %v538
    %v540 = vpop.f32.mrf.mxu0
    %541 = vdwg.mxu0
    %v542 = vmax.f32 %v539, 0.0
    %v543 = vld [vmem:[#allocation2 + $0x218] sm:$0xff]
    %v544 = vld [vmem:[#allocation2 + $0x220] sm:$0xff]
    %v545 = vld [vmem:[#allocation2 + $0x228] sm:$0xff]
    %v546 = vld [vmem:[#allocation2 + $0x230] sm:$0xff]
    %v547 = vld [vmem:[#allocation2 + $0x238] sm:$0xff]
    %v548 = vld [vmem:[#allocation2 + $0x240] sm:$0xff]
    %v549 = vld [vmem:[#allocation2 + $0x248] sm:$0xff]
    %v550 = vld [vmem:[#allocation2 + $0x250] sm:$0xff]
    %v551 = vld [vmem:[#allocation2 + $0x258] sm:$0xff]
    %v552 = vld [vmem:[#allocation2 + $0x260] sm:$0xff]
    %v553 = vld [vmem:[#allocation2 + $0x268] sm:$0xff]
    %v554 = vld [vmem:[#allocation2 + $0x270] sm:$0xff]
    %v555 = vld [vmem:[#allocation2 + $0x278] sm:$0xff]
    %v556 = vld [vmem:[#allocation2 + $0x280] sm:$0xff]
    %v557 = vld [vmem:[#allocation2 + $0x288] sm:$0xff]
    %v558 = vld [vmem:[#allocation2 + $0x290] sm:$0xff]
    %559 = vmatprep.subr.mxu0 0.0
    %560 = vmatpush1.msra.mxu0 %v558
    %561 = vmatprep.subr.mxu0 0.0
    %562 = vmatpush1.msra.mxu0 %v557
    %563 = vmatprep.subr.mxu0 0.0
    %564 = vmatpush1.msra.mxu0 %v556
    %565 = vmatprep.subr.mxu0 0.0
    %566 = vmatpush1.msra.mxu0 %v555
    %567 = vmatprep.subr.mxu0 0.0
    %568 = vmatpush1.msra.mxu0 %v554
    %569 = vmatprep.subr.mxu0 0.0
    %570 = vmatpush1.msra.mxu0 %v553
    %571 = vmatprep.subr.mxu0 0.0
    %572 = vmatpush1.msra.mxu0 %v552
    %573 = vmatprep.subr.mxu0 0.0
    %574 = vmatpush1.msra.mxu0 %v551
    %575 = vmatprep.subr.mxu0 0.0
    %576 = vmatpush1.msra.mxu0 %v550
    %577 = vmatprep.subr.mxu0 0.0
    %578 = vmatpush1.msra.mxu0 %v549
    %579 = vmatprep.subr.mxu0 0.0
    %580 = vmatpush1.msra.mxu0 %v548
    %581 = vmatprep.subr.mxu0 0.0
    %582 = vmatpush1.msra.mxu0 %v547
    %583 = vmatprep.subr.mxu0 0.0
    %584 = vmatpush1.msra.mxu0 %v546
    %585 = vmatprep.subr.mxu0 0.0
    %586 = vmatpush1.msra.mxu0 %v545
    %587 = vmatprep.subr.mxu0 0.0
    %588 = vmatpush1.msra.mxu0 %v544
    %589 = vmatprep.subr.mxu0 0.0
    %590 = vmatpush1.msra.mxu0 %v543
    %591 = vmatprep.subr.mxu0 0.0
    %592 = vmatpush2.msra.mxu0 0.0
    %593 = vmatprep.subr.mxu0 0.0
    %594 = vmatpush2.msra.mxu0 0.0
    %595 = vmatprep.subr.mxu0 0.0
    %596 = vmatpush2.msra.mxu0 0.0
    %597 = vmatprep.subr.mxu0 0.0
    %598 = vmatpush2.msra.mxu0 0.0
    %599 = vmatprep.subr.mxu0 0.0
    %600 = vmatpush2.msra.mxu0 0.0
    %601 = vmatprep.subr.mxu0 0.0
    %602 = vmatpush2.msra.mxu0 0.0
    %603 = vmatprep.subr.mxu0 0.0
    %604 = vmatpush2.msra.mxu0 0.0
    %605 = vmatprep.subr.mxu0 0.0
    %606 = vmatpush2.msra.mxu0 0.0
    %607 = vmatprep.subr.mxu0 0.0
    %608 = vmatpush2.msra.mxu0 0.0
    %609 = vmatprep.subr.mxu0 0.0
    %610 = vmatpush2.msra.mxu0 0.0
    %611 = vmatprep.subr.mxu0 0.0
    %612 = vmatpush2.msra.mxu0 0.0
    %613 = vmatprep.subr.mxu0 0.0
    %614 = vmatpush2.msra.mxu0 0.0
    %615 = vmatprep.subr.mxu0 0.0
    %616 = vmatpush2.msra.mxu0 0.0
    %617 = vmatprep.subr.mxu0 0.0
    %618 = vmatpush2.msra.mxu0 0.0
    %619 = vmatprep.subr.mxu0 0.0
    %620 = vmatpush2.msra.mxu0 0.0
    %621 = vmatprep.subr.mxu0 0.0
    %622 = vmatpush2.msra.mxu0 0.0
    %623 = vmatprep.mubr.f32.mxu0 0.0
    %624 = vmatmul.mubr.f32.gmra.mxu0 %v542
    %v625 = vpop.f32.mrf.mxu0
    %v626 = vadd.f32 0.0, %v625
    %v627 = vpop.f32.mrf.mxu0
    %628 = vdwg.mxu0
    %v629 = vmax.f32 %v626, 0.0
    %v630 = vld [vmem:[#allocation2 + $0x298] sm:$0xff]
    %v631 = vld [vmem:[#allocation2 + $0x2a0] sm:$0xff]
    %v632 = vld [vmem:[#allocation2 + $0x2a8] sm:$0xff]
    %v633 = vld [vmem:[#allocation2 + $0x2b0] sm:$0xff]
    %v634 = vld [vmem:[#allocation2 + $0x2b8] sm:$0xff]
    %v635 = vld [vmem:[#allocation2 + $0x2c0] sm:$0xff]
    %v636 = vld [vmem:[#allocation2 + $0x2c8] sm:$0xff]
    %v637 = vld [vmem:[#allocation2 + $0x2d0] sm:$0xff]
    %v638 = vld [vmem:[#allocation2 + $0x2d8] sm:$0xff]
    %v639 = vld [vmem:[#allocation2 + $0x2e0] sm:$0xff]
    %v640 = vld [vmem:[#allocation2 + $0x2e8] sm:$0xff]
    %v641 = vld [vmem:[#allocation2 + $0x2f0] sm:$0xff]
    %v642 = vld [vmem:[#allocation2 + $0x2f8] sm:$0xff]
    %v643 = vld [vmem:[#allocation2 + $0x300] sm:$0xff]
    %v644 = vld [vmem:[#allocation2 + $0x308] sm:$0xff]
    %v645 = vld [vmem:[#allocation2 + $0x310] sm:$0xff]
    %646 = vmatprep.subr.mxu0 0.0
    %647 = vmatpush1.msra.mxu0 %v645
    %648 = vmatprep.subr.mxu0 0.0
    %649 = vmatpush1.msra.mxu0 %v644
    %650 = vmatprep.subr.mxu0 0.0
    %651 = vmatpush1.msra.mxu0 %v643
    %652 = vmatprep.subr.mxu0 0.0
    %653 = vmatpush1.msra.mxu0 %v642
    %654 = vmatprep.subr.mxu0 0.0
    %655 = vmatpush1.msra.mxu0 %v641
    %656 = vmatprep.subr.mxu0 0.0
    %657 = vmatpush1.msra.mxu0 %v640
    %658 = vmatprep.subr.mxu0 0.0
    %659 = vmatpush1.msra.mxu0 %v639
    %660 = vmatprep.subr.mxu0 0.0
    %661 = vmatpush1.msra.mxu0 %v638
    %662 = vmatprep.subr.mxu0 0.0
    %663 = vmatpush1.msra.mxu0 %v637
    %664 = vmatprep.subr.mxu0 0.0
    %665 = vmatpush1.msra.mxu0 %v636
    %666 = vmatprep.subr.mxu0 0.0
    %667 = vmatpush1.msra.mxu0 %v635
    %668 = vmatprep.subr.mxu0 0.0
    %669 = vmatpush1.msra.mxu0 %v634
    %670 = vmatprep.subr.mxu0 0.0
    %671 = vmatpush1.msra.mxu0 %v633
    %672 = vmatprep.subr.mxu0 0.0
    %673 = vmatpush1.msra.mxu0 %v632
    %674 = vmatprep.subr.mxu0 0.0
    %675 = vmatpush1.msra.mxu0 %v631
    %676 = vmatprep.subr.mxu0 0.0
    %677 = vmatpush1.msra.mxu0 %v630
    %678 = vmatprep.subr.mxu0 0.0
    %679 = vmatpush2.msra.mxu0 0.0
    %680 = vmatprep.subr.mxu0 0.0
    %681 = vmatpush2.msra.mxu0 0.0
    %682 = vmatprep.subr.mxu0 0.0
    %683 = vmatpush2.msra.mxu0 0.0
    %684 = vmatprep.subr.mxu0 0.0
    %685 = vmatpush2.msra.mxu0 0.0
    %686 = vmatprep.subr.mxu0 0.0
    %687 = vmatpush2.msra.mxu0 0.0
    %688 = vmatprep.subr.mxu0 0.0
    %689 = vmatpush2.msra.mxu0 0.0
    %690 = vmatprep.subr.mxu0 0.0
    %691 = vmatpush2.msra.mxu0 0.0
    %692 = vmatprep.subr.mxu0 0.0
    %693 = vmatpush2.msra.mxu0 0.0
    %694 = vmatprep.subr.mxu0 0.0
    %695 = vmatpush2.msra.mxu0 0.0
    %696 = vmatprep.subr.mxu0 0.0
    %697 = vmatpush2.msra.mxu0 0.0
    %698 = vmatprep.subr.mxu0 0.0
    %699 = vmatpush2.msra.mxu0 0.0
    %700 = vmatprep.subr.mxu0 0.0
    %701 = vmatpush2.msra.mxu0 0.0
    %702 = vmatprep.subr.mxu0 0.0
    %703 = vmatpush2.msra.mxu0 0.0
    %704 = vmatprep.subr.mxu0 0.0
    %705 = vmatpush2.msra.mxu0 0.0
    %706 = vmatprep.subr.mxu0 0.0
    %707 = vmatpush2.msra.mxu0 0.0
    %708 = vmatprep.subr.mxu0 0.0
    %709 = vmatpush2.msra.mxu0 0.0
    %710 = vmatprep.mubr.f32.mxu0 0.0
    %711 = vmatmul.mubr.f32.gmra.mxu0 %v629
    %v712 = vpop.f32.mrf.mxu0
    %v713 = vadd.f32 0.0, %v712
    %v714 = vpop.f32.mrf.mxu0
    %715 = vdwg.mxu0
    %vm716 = vcmask 64512
    %717 = vst.msk [vmem:[#allocation5] sm:$0xff] %vm716, %v713
    // Predicated region
    $region18: #{tpu_custom_call.1} parent=1 // pred_check
      _
    $region19: #{tpu_custom_call.1} parent=1 // pred_check_branch
      %719 = sbr.rel (0) target = $region21
    $region20: #{tpu_custom_call.1} parent=1 // pred_region
      %s721 = ssub.s32 128, 128
      %722 = vsyncadd [#allocation4], %s721
      %s724 = sshll.u32 [#allocation5], 4
      %s725 = int_to_ptr.vmem [resolvable:$true] %s724
      %727 = dma.vmem_to_hbm [thread:$0]  %s725, 128, %s3, [#allocation4]
    $region21: #{tpu_custom_call.1} parent=1 // pred_fallthru
      _
    // Predicated region
    $region22: #{tpu_custom_call.1} parent=1 // pred_check
      _
    $region23: #{tpu_custom_call.1} parent=1 // pred_check_branch
      %729 = sbr.rel (0) target = $region25
    $region24: #{tpu_custom_call.1} parent=1 // pred_region
      %730 = dma.done [#allocation4], 128
    $region25: #{tpu_custom_call.1} parent=1 // pred_fallthru
      _
    %731 = vsyncpa [#allocation3], 1
    %732 = vsyncpa [#allocation4], 1

</llo_original>
